<compile_context>
chip_gen: v7x
topology: tpu7x:2x2x1
jax: 0.10.0
libtpu: 0.0.40
codegen_flags: <defaults>
</compile_context>

<pallas_src>
import functools
import math

import jax
import jax.numpy as jnp
from jax.experimental import pallas as pl
from jax.experimental.pallas import tpu as pltpu


def _round_up(x, m):
    return ((x + m - 1) // m) * m


def _vmem_capacity_bytes():
    """Physical VMEM per core; 64 MiB (v7x-safe) fallback if the query is unavailable."""
    try:
        info = pltpu.get_tpu_info()
        for attr in ("vmem_capacity_bytes", "vmem_size_bytes", "vmem_bytes"):
            cap = getattr(info, attr, None)
            if cap:
                return int(cap)
    except Exception:
        pass
    return 64 << 20


def _vmem_need(tm, th, in_p, out_p, cbytes, obytes):
    """Resident VMEM for one pipelined step (double-buffered inputs/outputs + f32 accumulator)."""
    return (2 * tm * in_p * cbytes          # x row tile
            + 2 * in_p * th * cbytes        # W1 tile
            + 2 * th * out_p * cbytes       # W2 tile
            + 2 * (th + out_p) * 4          # biases (f32)
            + 2 * tm * out_p * obytes       # output tile
            + tm * out_p * 4)               # f32 accumulator scratch


def _choose_tiles(m_p16, hid_p, in_p, out_p, cbytes, obytes, vmem_budget,
                  block_m=None, block_h=None):
    """Pick (TM, TH): prefer the largest TM (arithmetic intensity ~ TM since weights are
    re-streamed per row tile), then the largest TH, that fits the per-generation VMEM budget."""
    if block_m is not None:
        tm_cands = [min(_round_up(block_m, 16), m_p16)]
    else:
        tm_cands = [min(t, m_p16) for t in (1024, 768, 512, 384, 256, 128, 64, 32, 16)]
    if block_h is not None:
        th_cands = [min(_round_up(block_h, 128), hid_p)]
    else:
        th_cands = [min(t, hid_p) for t in (1024, 512, 256, 128)]
    # TH must evenly divide the (pre-packed) padded hidden dim; 128 always does.
    th_cands = [t for t in th_cands if hid_p % t == 0] or [128]
    tm_cands = list(dict.fromkeys(tm_cands))
    th_cands = list(dict.fromkeys(th_cands))
    for tm in tm_cands:
        for th in th_cands:
            if _vmem_need(tm, th, in_p, out_p, cbytes, obytes) <= vmem_budget:
                return tm, th
    return tm_cands[-1], th_cands[-1]


def _mlp_kernel(x_ref, w1_ref, b1_ref, w2_ref, b2_ref, o_ref, acc_ref, *, n_sub, th_sub):
    """One (TM x TH) reduction step. The TH tile is split into n_sub sub-chunks (unrolled at
    trace time) so the MXU matmuls of one chunk overlap the VALU erf-GELU of the previous one."""
    k = pl.program_id(1)

    @pl.when(k == 0)
    def _init():
        acc_ref[...] = jnp.zeros_like(acc_ref)

    x = x_ref[...]
    inv_sqrt2 = 1.0 / math.sqrt(2.0)

    step = None
    for j in range(n_sub):
        lo = j * th_sub
        hi = lo + th_sub
        # fc1 sub-tile on the MXU with f32 accumulation; bias + exact (erf) GELU stay in f32.
        h = jnp.dot(x, w1_ref[:, lo:hi], preferred_element_type=jnp.float32)
        h = h + b1_ref[:, lo:hi].astype(jnp.float32)        # (1, th_sub) broadcasts over rows
        h = 0.5 * h * (1.0 + jax.lax.erf(h * inv_sqrt2))
        # Dropout(p=0.0) is the identity.
        # TODO(synk): stochastic dropout (drop > 0) not implemented; module default is drop=0.0.
        p = jnp.dot(h.astype(w2_ref.dtype), w2_ref[lo:hi, :],
                    preferred_element_type=jnp.float32)
        step = p if step is None else step + p

    acc_ref[...] += step                                     # single accumulator RMW per step

    @pl.when(k == pl.num_programs(1) - 1)
    def _finalize():
        o_ref[...] = (acc_ref[...] + b2_ref[...].astype(jnp.float32)).astype(o_ref.dtype)


def pack_mlp_params(w1, b1, w2, b2, compute_dtype=jnp.bfloat16):
    """Pad feature dims to multiples of 128 and cast matmul operands ONCE.

    Call this at init time (hoisted out of the forward path) so the forward pass never
    re-materializes padded copies of the weights in HBM.

    w1: (in_features, hidden), b1: (hidden,)   (weights stored transposed vs. PyTorch)
    w2: (hidden, out_features), b2: (out_features,)
    """
    in_features, hidden = w1.shape
    assert w2.shape[0] == hidden
    out_features = w2.shape[1]

    in_p = _round_up(in_features, 128)
    hid_p = _round_up(hidden, 128)
    out_p = _round_up(out_features, 128)

    w1_p = jnp.pad(w1, ((0, in_p - in_features), (0, hid_p - hidden))).astype(compute_dtype)
    w2_p = jnp.pad(w2, ((0, hid_p - hidden), (0, out_p - out_features))).astype(compute_dtype)
    b1_p = jnp.pad(b1, (0, hid_p - hidden)).astype(jnp.float32).reshape(1, hid_p)
    b2_p = jnp.pad(b2, (0, out_p - out_features)).astype(jnp.float32).reshape(1, out_p)
    return dict(w1=w1_p, b1=b1_p, w2=w2_p, b2=b2_p,
                in_features=in_features, hidden=hidden, out_features=out_features)


def mlp_pallas_packed(x, packed, *, block_m=None, block_h=None):
    """Fused MLP forward on pre-packed parameters (from pack_mlp_params).

    x: (..., in_features). Returns (..., out_features) in x.dtype.
    """
    w1_p, b1_p, w2_p, b2_p = packed["w1"], packed["b1"], packed["w2"], packed["b2"]
    in_features = packed["in_features"]
    out_features = packed["out_features"]
    compute_dtype = w1_p.dtype
    in_p, hid_p = w1_p.shape
    out_p = w2_p.shape[1]
    out_dtype = x.dtype

    lead_shape = x.shape[:-1]
    assert x.shape[-1] == in_features
    m = 1
    for d in lead_shape:
        m *= d

    cbytes = jnp.dtype(compute_dtype).itemsize
    obytes = jnp.dtype(out_dtype).itemsize

    # Per-generation VMEM budget: ~96 MiB on 128 MiB chips (v5e/v6e), ~48 MiB on v7x (64 MiB).
    cap = _vmem_capacity_bytes()
    budget = max((cap * 3) // 4, 16 << 20)

    # Rows padded to the bf16 sublane tile (16); shape/VMEM-aware row & hidden tiles.
    m_p16 = _round_up(max(m, 16), 16)
    tm, th = _choose_tiles(m_p16, hid_p, in_p, out_p, cbytes, obytes, budget,
                           block_m=block_m, block_h=block_h)
    m_p = _round_up(m_p16, tm)

    # Pad / cast the activations only when strictly necessary (zeros don't change the result).
    x2d = x.reshape(m, in_features)
    if m_p != m or in_p != in_features:
        x2d = jnp.pad(x2d, ((0, m_p - m), (0, in_p - in_features)))
    if x2d.dtype != compute_dtype:
        x2d = x2d.astype(compute_dtype)

    grid = (m_p // tm, hid_p // th)

    # Split the TH tile in two inside the kernel so the MXU matmul of one sub-chunk overlaps
    # the erf-GELU VALU polynomial of the other.
    n_sub = 2 if th % 256 == 0 else 1
    th_sub = th // n_sub

    need = _vmem_need(tm, th, in_p, out_p, cbytes, obytes)
    vmem_limit = min(need + (8 << 20), cap - (4 << 20))
    vmem_limit = max(vmem_limit, need + (1 << 20), 32 << 20)
    vmem_limit = int(min(vmem_limit, cap))

    # Weights are streamed from HBM once per row tile -> scale their bytes by grid[0].
    cost = pl.CostEstimate(
        flops=2 * m_p * (in_p * hid_p + hid_p * out_p),
        transcendentals=m_p * hid_p,
        bytes_accessed=(m_p * in_p * cbytes
                        + grid[0] * (w1_p.size + w2_p.size) * cbytes
                        + grid[0] * (b1_p.size + b2_p.size) * 4
                        + m_p * out_p * obytes),
    )

    out2d = pl.pallas_call(
        functools.partial(_mlp_kernel, n_sub=n_sub, th_sub=th_sub),
        out_shape=jax.ShapeDtypeStruct((m_p, out_p), out_dtype),
        grid_spec=pltpu.PrefetchScalarGridSpec(
            num_scalar_prefetch=0,
            grid=grid,
            in_specs=[
                pl.BlockSpec((tm, in_p), lambda i, k: (i, 0)),     # x row tile
                pl.BlockSpec((in_p, th), lambda i, k: (0, k)),     # W1[:, kh]
                pl.BlockSpec((1, th), lambda i, k: (0, k)),        # b1[kh]
                pl.BlockSpec((th, out_p), lambda i, k: (k, 0)),    # W2[kh, :]
                pl.BlockSpec((1, out_p), lambda i, k: (0, 0)),     # b2 (resident)
            ],
            out_specs=pl.BlockSpec((tm, out_p), lambda i, k: (i, 0)),
            scratch_shapes=[pltpu.VMEM((tm, out_p), jnp.float32)],
        ),
        compiler_params=pltpu.CompilerParams(
            dimension_semantics=("parallel", "arbitrary"),
            vmem_limit_bytes=vmem_limit,
        ),
        cost_estimate=cost,
    )(x2d, w1_p, b1_p, w2_p, b2_p)

    out2d = out2d[:m, :out_features]
    return out2d.reshape(*lead_shape, out_features)


def mlp_pallas(x, w1, b1, w2, b2, *, block_m=None, block_h=None, compute_dtype=jnp.bfloat16):
    """Convenience wrapper: packs (pads + casts) the weights and runs the fused kernel.

    For repeated calls, hoist pack_mlp_params() out of the forward path and call
    mlp_pallas_packed() directly. Use compute_dtype=jnp.float32 for strict f32 parity.
    """
    packed = pack_mlp_params(w1, b1, w2, b2, compute_dtype=compute_dtype)
    return mlp_pallas_packed(x, packed, block_m=block_m, block_h=block_h)


def mlp_reference(x, w1, b1, w2, b2, compute_dtype=jnp.bfloat16):
    """Plain-JAX reference mirroring the kernel's compute dtypes (bf16 operands, f32 accum)."""
    lead = x.shape[:-1]
    x2 = x.reshape(-1, w1.shape[0]).astype(compute_dtype)
    h = jnp.dot(x2, w1.astype(compute_dtype), preferred_element_type=jnp.float32)
    h = h + b1.astype(jnp.float32)
    h = 0.5 * h * (1.0 + jax.lax.erf(h / math.sqrt(2.0)))
    o = jnp.dot(h.astype(compute_dtype), w2.astype(compute_dtype),
                preferred_element_type=jnp.float32)
    o = o + b2.astype(jnp.float32)
    return o.astype(x.dtype).reshape(*lead, w2.shape[1])


def init_mlp_params(key, in_features, hidden_features, out_features, dtype=jnp.float32):
    """Deterministic init mimicking nn.Linear's default uniform(-1/sqrt(fan_in), +1/sqrt(fan_in))."""
    k1, k2, k3, k4 = jax.random.split(key, 4)
    bound1 = 1.0 / math.sqrt(in_features)
    bound2 = 1.0 / math.sqrt(hidden_features)
    # Stored transposed vs. PyTorch: (in, hidden) and (hidden, out).
    w1 = jax.random.uniform(k1, (in_features, hidden_features), dtype, -bound1, bound1)
    b1 = jax.random.uniform(k2, (hidden_features,), dtype, -bound1, bound1)
    w2 = jax.random.uniform(k3, (hidden_features, out_features), dtype, -bound2, bound2)
    b2 = jax.random.uniform(k4, (out_features,), dtype, -bound2, bound2)
    return w1, b1, w2, b2


if __name__ == "__main__":
    key = jax.random.PRNGKey(0)

    # --- Test 1: small shapes matching the module defaults (out_features = in_features). ---
    kx, kp, key = jax.random.split(key, 3)
    batch, seq, in_features = 2, 8, 16
    hidden_features, out_features = 32, 16
    x = jax.random.normal(kx, (batch, seq, in_features), dtype=jnp.float32)
    w1, b1, w2, b2 = init_mlp_params(kp, in_features, hidden_features, out_features)

    out = mlp_pallas(x, w1, b1, w2, b2)
    jax.block_until_ready(out)
    ref = mlp_reference(x, w1, b1, w2, b2)
    assert out.shape == ref.shape
    assert jnp.allclose(out, ref, atol=2e-2, rtol=2e-2), "mismatch vs reference (small)"

    # --- Test 2: pre-packed weights + explicit tiles exercising multiple row tiles and the
    # hidden-reduction axis (grid = (3, 2)) and the in-kernel GELU/matmul overlap (n_sub=2). ---
    kx2, kp2 = jax.random.split(key)
    batch2, seq2, in2, hid2, out2_f = 4, 160, 256, 1024, 384
    x2 = jax.random.normal(kx2, (batch2, seq2, in2), dtype=jnp.float32)
    w1b, b1b, w2b, b2b = init_mlp_params(kp2, in2, hid2, out2_f)

    packed = pack_mlp_params(w1b, b1b, w2b, b2b)   # hoisted out of the forward path
    out_big = mlp_pallas_packed(x2, packed, block_m=256, block_h=512)
    jax.block_until_ready(out_big)
    ref_big = mlp_reference(x2, w1b, b1b, w2b, b2b)
    assert out_big.shape == ref_big.shape
    assert jnp.allclose(out_big, ref_big, atol=2e-2, rtol=2e-2), "mismatch vs reference (tiled)"

    # --- Test 3: automatic shape/VMEM-aware tile selection on the same inputs. ---
    out_auto = mlp_pallas_packed(x2, packed)
    jax.block_until_ready(out_auto)
    assert jnp.allclose(out_auto, ref_big, atol=2e-2, rtol=2e-2), "mismatch vs reference (auto)"

    print("KERNEL_OK")
</pallas_src>

<mosaic_0001>
module attributes {stable_mosaic.version = 11 : i64} {
  func.func @_mlp_kernel(%arg0: i32, %arg1: i32, %arg2: memref<16x128xbf16, #tpu.memory_space<vmem>>, %arg3: memref<128x128xbf16, #tpu.memory_space<vmem>>, %arg4: memref<1x128xf32, #tpu.memory_space<vmem>>, %arg5: memref<128x128xbf16, #tpu.memory_space<vmem>>, %arg6: memref<1x128xf32, #tpu.memory_space<vmem>>, %arg7: memref<16x128xf32, #tpu.memory_space<vmem>>, %arg8: memref<16x128xf32, #tpu.memory_space<vmem>>) attributes {dimension_semantics = [#tpu.dimension_semantics<parallel>, #tpu.dimension_semantics<arbitrary>], iteration_bounds = array<i64: 1, 1>, scalar_prefetch = 0 : i64, scratch_operands = 1 : i64, tpu.core_type = #tpu.core_type<tc>, window_params = [{transform_indices = @transform_0, window_bounds = array<i64: 16, 128>}, {transform_indices = @transform_1, window_bounds = array<i64: 128, 128>}, {transform_indices = @transform_2, window_bounds = array<i64: 1, 128>}, {transform_indices = @transform_3, window_bounds = array<i64: 128, 128>}, {pipeline_mode = #tpu.pipeline_mode<synchronous>, transform_indices = @transform_4, window_bounds = array<i64: 1, 128>}, {transform_indices = @transform_5, window_bounds = array<i64: 16, 128>}]} {
    %c0_i32 = arith.constant 0 : i32
    %0 = arith.cmpi eq, %arg1, %c0_i32 : i32
    %1 = arith.extui %0 : i1 to i32
    %c0_i32_0 = arith.constant 0 : i32
    %2 = arith.cmpi ne, %1, %c0_i32_0 : i32
    scf.if %2 {
      %cst_18 = arith.constant 0.000000e+00 : f32
      %26 = vector.broadcast %cst_18 : f32 to vector<16x128xf32>
      %c0_19 = arith.constant 0 : index
      %c0_20 = arith.constant 0 : index
      %27 = vector.load %arg8[%c0_19, %c0_20] : memref<16x128xf32, #tpu.memory_space<vmem>>, vector<16x128xf32>
      tpu.vector_store %arg8[%c0_19, %c0_20], %26 {strides = array<i32>} : memref<16x128xf32, #tpu.memory_space<vmem>>, vector<16x128xf32>,
    } else {
    }
    %c0 = arith.constant 0 : index
    %c0_1 = arith.constant 0 : index
    %3 = vector.load %arg2[%c0, %c0_1] : memref<16x128xbf16, #tpu.memory_space<vmem>>, vector<16x128xbf16>
    %c0_2 = arith.constant 0 : index
    %c0_3 = arith.constant 0 : index
    %4 = vector.load %arg3[%c0_2, %c0_3] : memref<128x128xbf16, #tpu.memory_space<vmem>>, vector<128x128xbf16>
    %cst = arith.constant dense<0.000000e+00> : vector<16x128xf32>
    %5 = tpu.matmul %3, %4, %cst {dimension_numbers = #tpu.dot_dimension_numbers<[1], [0], [0], [1], [0, 0, 1, 1], [], []>} : vector<16x128xbf16>, vector<128x128xbf16>, vector<16x128xf32> -> vector<16x128xf32>
    %c0_4 = arith.constant 0 : index
    %c0_5 = arith.constant 0 : index
    %6 = vector.load %arg4[%c0_4, %c0_5] : memref<1x128xf32, #tpu.memory_space<vmem>>, vector<1x128xf32>
    %7 = vector.broadcast %6 : vector<1x128xf32> to vector<16x128xf32>
    %8 = arith.addf %5, %7 : vector<16x128xf32>
    %cst_6 = arith.constant 5.000000e-01 : f32
    %9 = vector.broadcast %cst_6 : f32 to vector<16x128xf32>
    %10 = arith.mulf %9, %8 : vector<16x128xf32>
    %cst_7 = arith.constant 0.707106769 : f32
    %11 = vector.broadcast %cst_7 : f32 to vector<16x128xf32>
    %12 = arith.mulf %8, %11 : vector<16x128xf32>
    %13 = math.erf %12 : vector<16x128xf32>
    %cst_8 = arith.constant 1.000000e+00 : f32
    %14 = vector.broadcast %cst_8 : f32 to vector<16x128xf32>
    %15 = arith.addf %14, %13 : vector<16x128xf32>
    %16 = arith.mulf %10, %15 : vector<16x128xf32>
    %17 = arith.truncf %16 : vector<16x128xf32> to vector<16x128xbf16>
    %c0_9 = arith.constant 0 : index
    %c0_10 = arith.constant 0 : index
    %18 = vector.load %arg5[%c0_9, %c0_10] : memref<128x128xbf16, #tpu.memory_space<vmem>>, vector<128x128xbf16>
    %cst_11 = arith.constant dense<0.000000e+00> : vector<16x128xf32>
    %19 = tpu.matmul %17, %18, %cst_11 {dimension_numbers = #tpu.dot_dimension_numbers<[1], [0], [0], [1], [0, 0, 1, 1], [], []>} : vector<16x128xbf16>, vector<128x128xbf16>, vector<16x128xf32> -> vector<16x128xf32>
    %c0_12 = arith.constant 0 : index
    %c0_13 = arith.constant 0 : index
    %20 = vector.load %arg8[%c0_12, %c0_13] : memref<16x128xf32, #tpu.memory_space<vmem>>, vector<16x128xf32>
    %21 = arith.addf %20, %19 : vector<16x128xf32>
    %c0_14 = arith.constant 0 : index
    %c0_15 = arith.constant 0 : index
    %22 = vector.load %arg8[%c0_14, %c0_15] : memref<16x128xf32, #tpu.memory_space<vmem>>, vector<16x128xf32>
    tpu.vector_store %arg8[%c0_14, %c0_15], %21 {strides = array<i32>} : memref<16x128xf32, #tpu.memory_space<vmem>>, vector<16x128xf32>,
    %c0_i32_16 = arith.constant 0 : i32
    %23 = arith.cmpi eq, %arg1, %c0_i32_16 : i32
    %24 = arith.extui %23 : i1 to i32
    %c0_i32_17 = arith.constant 0 : i32
    %25 = arith.cmpi ne, %24, %c0_i32_17 : i32
    scf.if %25 {
      %c0_18 = arith.constant 0 : index
      %c0_19 = arith.constant 0 : index
      %26 = vector.load %arg8[%c0_18, %c0_19] : memref<16x128xf32, #tpu.memory_space<vmem>>, vector<16x128xf32>
      %c0_20 = arith.constant 0 : index
      %c0_21 = arith.constant 0 : index
      %27 = vector.load %arg6[%c0_20, %c0_21] : memref<1x128xf32, #tpu.memory_space<vmem>>, vector<1x128xf32>
      %28 = vector.broadcast %27 : vector<1x128xf32> to vector<16x128xf32>
      %29 = arith.addf %26, %28 : vector<16x128xf32>
      %c0_22 = arith.constant 0 : index
      %c0_23 = arith.constant 0 : index
      %30 = vector.load %arg7[%c0_22, %c0_23] : memref<16x128xf32, #tpu.memory_space<vmem>>, vector<16x128xf32>
      tpu.vector_store %arg7[%c0_22, %c0_23], %29 {strides = array<i32>} : memref<16x128xf32, #tpu.memory_space<vmem>>, vector<16x128xf32>,
    } else {
    }
    return
  }
  func.func @transform_0(%arg0: i32, %arg1: i32) -> (i32, i32) {
    %c0_i32 = arith.constant 0 : i32
    %c0_i32_0 = arith.constant 0 : i32
    return %arg0, %c0_i32 : i32, i32
  }
  func.func @transform_1(%arg0: i32, %arg1: i32) -> (i32, i32) {
    %c0_i32 = arith.constant 0 : i32
    %c0_i32_0 = arith.constant 0 : i32
    return %c0_i32, %arg1 : i32, i32
  }
  func.func @transform_2(%arg0: i32, %arg1: i32) -> (i32, i32) {
    %c0_i32 = arith.constant 0 : i32
    %c0_i32_0 = arith.constant 0 : i32
    return %c0_i32, %arg1 : i32, i32
  }
  func.func @transform_3(%arg0: i32, %arg1: i32) -> (i32, i32) {
    %c0_i32 = arith.constant 0 : i32
    %c0_i32_0 = arith.constant 0 : i32
    return %arg1, %c0_i32 : i32, i32
  }
  func.func @transform_4(%arg0: i32, %arg1: i32) -> (i32, i32) {
    %c0_i32 = arith.constant 0 : i32
    %c0_i32_0 = arith.constant 0 : i32
    %c0_i32_1 = arith.constant 0 : i32
    return %c0_i32, %c0_i32_0 : i32, i32
  }
  func.func @transform_5(%arg0: i32, %arg1: i32) -> (i32, i32) {
    %c0_i32 = arith.constant 0 : i32
    %c0_i32_0 = arith.constant 0 : i32
    return %arg0, %c0_i32 : i32, i32
  }
}

</mosaic_0001>

<llo_original>
// kernel: tpu_custom_call.1
$region0: #{tpu_custom_call.1}
  #allocation0 [shape = 'u32[]', space=smem, size = 0x4, offset = 0x4, fixed_abs, tag = 'smem constant byte address 0x4 - core index']
  #allocation1 [shape = 'u32[144,128]{1,0:T(1,128)}', space=vmem, size = 0x12000, scoped, tag = 'internal scratch']
  #allocation2 [shape = 'f32[16,128]{1,0:T(8,128)}', space=vmem, size = 0x2000, scoped, tag = 'scratch operand']
  %s0 = inlined_call_operand.hbm [shape: bf16[16,128], index: 0, kind: input, shape index: {}]
  %s1 = inlined_call_operand.hbm [shape: bf16[128,128], index: 1, kind: input, shape index: {}]
  %s2 = inlined_call_operand.vmem [shape: f32[1,128], index: 2, kind: input, shape index: {}]
  %s3 = inlined_call_operand.hbm [shape: bf16[128,128], index: 3, kind: input, shape index: {}]
  %s4 = inlined_call_operand.vmem [shape: f32[1,128], index: 4, kind: input, shape index: {}]
  %s5 = inlined_call_operand.hbm [shape: f32[16,128], index: 5, kind: output, shape index: {}]
  %s6 = sld [smem:[#allocation0]]
  $region50: #{tpu_custom_call.1} parent=0
    _
  %s8 = ssub.s32 1, %s6
  %s9 = scalar_select 0, %s8, %s6
  $region1: #{tpu_custom_call.1} parent=0
    #allocation3 [shape = 'u8[4096]{0}', space=vmem, size = 0x1000, scoped, tag = 'input window, operand 0, single buffered']
    #allocation4 [shape = 's32[1]{0}', space=sflag, size = 0x4, scoped, tag = 'scoped memory for tpu_custom_call.1']
    #allocation5 [shape = 's32[1]{0}', space=sflag, size = 0x4, scoped, tag = 'scoped memory for tpu_custom_call.1']
    #allocation6 [shape = 'u8[32768]{0}', space=vmem, size = 0x8000, scoped, tag = 'input window, operand 1, single buffered']
    #allocation7 [shape = 's32[1]{0}', space=sflag, size = 0x4, scoped, tag = 'scoped memory for tpu_custom_call.1']
    #allocation8 [shape = 'u8[32768]{0}', space=vmem, size = 0x8000, scoped, tag = 'input window, operand 3, single buffered']
    #allocation9 [shape = 'u8[8192]{0}', space=vmem, size = 0x2000, scoped, tag = 'output window, operand 0, single buffered']
    %10 = vsyncpa [#allocation4], 0
    %11 = vsyncpa [#allocation7], 0
    %12 = vsyncpa [#allocation5], 0
    // Predicated region
    $region2: #{tpu_custom_call.1} parent=1 // pred_check
      _
    $region3: #{tpu_custom_call.1} parent=1 // pred_check_branch
      %14 = sbr.rel (0) target = $region5
    $region4: #{tpu_custom_call.1} parent=1 // pred_region
      %s16 = ssub.s32 128, 128
      %17 = vsyncadd [#allocation4], %s16
      %s18 = sshll.u32 [#allocation3], 4
      %s19 = int_to_ptr.vmem [resolvable:$true] %s18
      %24 = dma.hbm_to_vmem [thread:$0]  %s0, 128, %s19, [#allocation4], 64, 64, 4
    $region5: #{tpu_custom_call.1} parent=1 // pred_fallthru
      _
    // Predicated region
    $region6: #{tpu_custom_call.1} parent=1 // pred_check
      _
    $region7: #{tpu_custom_call.1} parent=1 // pred_check_branch
      %26 = sbr.rel (0) target = $region9
    $region8: #{tpu_custom_call.1} parent=1 // pred_region
      %s28 = ssub.s32 1024, 1024
      %29 = vsyncadd [#allocation7], %s28
      %s30 = sshll.u32 [#allocation6], 4
      %s31 = int_to_ptr.vmem [resolvable:$true] %s30
      %36 = dma.hbm_to_vmem [thread:$0]  %s1, 1024, %s31, [#allocation7], 64, 64, 4
    $region9: #{tpu_custom_call.1} parent=1 // pred_fallthru
      _
    // Predicated region
    $region10: #{tpu_custom_call.1} parent=1 // pred_check
      _
    $region11: #{tpu_custom_call.1} parent=1 // pred_check_branch
      %38 = sbr.rel (0) target = $region13
    $region12: #{tpu_custom_call.1} parent=1 // pred_region
      _
    $region13: #{tpu_custom_call.1} parent=1 // pred_fallthru
      _
    // Predicated region
    $region14: #{tpu_custom_call.1} parent=1 // pred_check
      _
    $region15: #{tpu_custom_call.1} parent=1 // pred_check_branch
      %40 = sbr.rel (0) target = $region17
    $region16: #{tpu_custom_call.1} parent=1 // pred_region
      %s42 = ssub.s32 1024, 1024
      %43 = vsyncadd [#allocation7], %s42
      %s44 = sshll.u32 [#allocation8], 4
      %s45 = int_to_ptr.vmem [resolvable:$true] %s44
      %50 = dma.hbm_to_vmem [thread:$0]  %s3, 1024, %s45, [#allocation7], 64, 64, 4
    $region17: #{tpu_custom_call.1} parent=1 // pred_fallthru
      _
    // Predicated region
    $region18: #{tpu_custom_call.1} parent=1 // pred_check
      _
    $region19: #{tpu_custom_call.1} parent=1 // pred_check_branch
      %52 = sbr.rel (0) target = $region21
    $region20: #{tpu_custom_call.1} parent=1 // pred_region
      _
    $region21: #{tpu_custom_call.1} parent=1 // pred_fallthru
      _
    // Predicated region
    $region22: #{tpu_custom_call.1} parent=1 // pred_check
      _
    $region23: #{tpu_custom_call.1} parent=1 // pred_check_branch
      %54 = sbr.rel (0) target = $region25
    $region24: #{tpu_custom_call.1} parent=1 // pred_region
      %55 = dma.done [#allocation4], 128
    $region25: #{tpu_custom_call.1} parent=1 // pred_fallthru
      _
    // Predicated region
    $region26: #{tpu_custom_call.1} parent=1 // pred_check
      _
    $region27: #{tpu_custom_call.1} parent=1 // pred_check_branch
      %57 = sbr.rel (0) target = $region29
    $region28: #{tpu_custom_call.1} parent=1 // pred_region
      %58 = dma.done [#allocation7], 1024
    $region29: #{tpu_custom_call.1} parent=1 // pred_fallthru
      _
    // Predicated region
    $region30: #{tpu_custom_call.1} parent=1 // pred_check
      _
    $region31: #{tpu_custom_call.1} parent=1 // pred_check_branch
      %60 = sbr.rel (0) target = $region33
    $region32: #{tpu_custom_call.1} parent=1 // pred_region
      %61 = dma.done [#allocation7], 1024
    $region33: #{tpu_custom_call.1} parent=1 // pred_fallthru
      _
    %p63 = scmp.eq.s32.totalorder 0, 0
    // Predicated region
    $region34: #{tpu_custom_call.1} parent=1 // pred_check
      %p64 = pneg %p63
    $region35: #{tpu_custom_call.1} parent=1 // pred_check_branch
      %66 = sbr.rel (%p64) target = $region37
    $region36: #{tpu_custom_call.1} parent=1 // pred_region
      %67 = vst [vmem:[#allocation2] sm:$0xff] 0.0
      %68 = vst [vmem:[#allocation2 + $0x8] sm:$0xff] 0.0
    $region37: #{tpu_custom_call.1} parent=1 // pred_fallthru
      _
    %v69 = vld [vmem:[#allocation3] sm:$0xf]
    %v70 = vld [vmem:[#allocation3 + $0x4] sm:$0xf]
    %v71 = vld [vmem:[#allocation6] sm:$0xf]
    %v72 = vld [vmem:[#allocation6 + $0x4] sm:$0xf]
    %v73 = vld [vmem:[#allocation6 + $0x8] sm:$0xf]
    %v74 = vld [vmem:[#allocation6 + $0xc] sm:$0xf]
    %v75 = vld [vmem:[#allocation6 + $0x10] sm:$0xf]
    %v76 = vld [vmem:[#allocation6 + $0x14] sm:$0xf]
    %v77 = vld [vmem:[#allocation6 + $0x18] sm:$0xf]
    %v78 = vld [vmem:[#allocation6 + $0x1c] sm:$0xf]
    %v79 = vld [vmem:[#allocation6 + $0x20] sm:$0xf]
    %v80 = vld [vmem:[#allocation6 + $0x24] sm:$0xf]
    %v81 = vld [vmem:[#allocation6 + $0x28] sm:$0xf]
    %v82 = vld [vmem:[#allocation6 + $0x2c] sm:$0xf]
    %v83 = vld [vmem:[#allocation6 + $0x30] sm:$0xf]
    %v84 = vld [vmem:[#allocation6 + $0x34] sm:$0xf]
    %v85 = vld [vmem:[#allocation6 + $0x38] sm:$0xf]
    %v86 = vld [vmem:[#allocation6 + $0x3c] sm:$0xf]
    %v87 = vld [vmem:[%s2] sm:$0x1]
    %v89 = vlaneseq
    %v90 = vshrl.u32 %v89, 7
    %v91 = vsub.s32 0, %v90
    %v92 = vrot.slane %v87, %v91
    %v96 = vunpack.c.l.b16 %v69
    %v97 = vunpack.c.l.b16 %v70
    %v98 = vpack.c.b16 %v97, %v96
    %v116 = vunpack.c.l.b16 %v71
    %v117 = vunpack.c.l.b16 %v72
    %v118 = vunpack.c.l.b16 %v73
    %v119 = vunpack.c.l.b16 %v74
    %v120 = vunpack.c.l.b16 %v75
    %v121 = vunpack.c.l.b16 %v76
    %v122 = vunpack.c.l.b16 %v77
    %v123 = vunpack.c.l.b16 %v78
    %v124 = vunpack.c.l.b16 %v79
    %v125 = vunpack.c.l.b16 %v80
    %v126 = vunpack.c.l.b16 %v81
    %v127 = vunpack.c.l.b16 %v82
    %v128 = vunpack.c.l.b16 %v83
    %v129 = vunpack.c.l.b16 %v84
    %v130 = vunpack.c.l.b16 %v85
    %v131 = vunpack.c.l.b16 %v86
    %v132 = vpack.c.b16 %v117, %v116
    %v133 = vpack.c.b16 %v119, %v118
    %v134 = vpack.c.b16 %v121, %v120
    %v135 = vpack.c.b16 %v123, %v122
    %v136 = vpack.c.b16 %v125, %v124
    %v137 = vpack.c.b16 %v127, %v126
    %v138 = vpack.c.b16 %v129, %v128
    %v139 = vpack.c.b16 %v131, %v130
    %148 = vmatprep.subr.bf16.mxu0 0
    %149 = vmatpush1.bf16.msra.mxu0 %v132
    %150 = vmatprep.subr.bf16.mxu0 0
    %151 = vmatpush1.bf16.msra.mxu0 %v133
    %152 = vmatprep.subr.bf16.mxu0 0
    %153 = vmatpush1.bf16.msra.mxu0 %v134
    %154 = vmatprep.subr.bf16.mxu0 0
    %155 = vmatpush1.bf16.msra.mxu0 %v135
    %156 = vmatprep.subr.bf16.mxu0 0
    %157 = vmatpush1.bf16.msra.mxu0 %v136
    %158 = vmatprep.subr.bf16.mxu0 0
    %159 = vmatpush1.bf16.msra.mxu0 %v137
    %160 = vmatprep.subr.bf16.mxu0 0
    %161 = vmatpush1.bf16.msra.mxu0 %v138
    %162 = vmatprep.subr.bf16.mxu0 0
    %163 = vmatpush1.bf16.msra.mxu0 %v139
    %164 = vmatprep.subr.bf16.mxu0 0
    %165 = vmatpush1.bf16.msra.mxu0 0
    %166 = vmatprep.subr.bf16.mxu0 0
    %167 = vmatpush1.bf16.msra.mxu0 0
    %168 = vmatprep.subr.bf16.mxu0 0
    %169 = vmatpush1.bf16.msra.mxu0 0
    %170 = vmatprep.subr.bf16.mxu0 0
    %171 = vmatpush1.bf16.msra.mxu0 0
    %172 = vmatprep.subr.bf16.mxu0 0
    %173 = vmatpush1.bf16.msra.mxu0 0
    %174 = vmatprep.subr.bf16.mxu0 0
    %175 = vmatpush1.bf16.msra.mxu0 0
    %176 = vmatprep.subr.bf16.mxu0 0
    %177 = vmatpush1.bf16.msra.mxu0 0
    %178 = vmatprep.subr.bf16.mxu0 0
    %179 = vmatpush1.bf16.msra.mxu0 0
    %180 = vmatprep.mubr.bf16.mxu0 0
    %181 = vmatmul.mubr.bf16.gmra.mrb[0].mxu0 %v98
    %v182 = vpop.f32.mrb[0].mxu0
    %v183 = vadd.f32 %v92, %v182
    %v184 = vpop.f32.mrb[0].mxu0
    %v185 = vpop.f32.mrb[0].mxu0
    %v186 = vadd.f32 %v92, %v185
    %v187 = vpop.f32.mrb[0].mxu0
    %188 = vdwg.mxu0
    %v189 = vmul.f32 %v183, 0.5
    %v190 = vmul.f32 %v186, 0.5
    %v191 = vmul.f32 %v183, 0.70710677
    %v192 = vmul.f32 %v186, 0.70710677
    %v193 = verf.f32.pop %v191
    %v194 = verf.f32.pop %v192
    %v195 = vadd.f32 %v193, 1.0
    %v196 = vadd.f32 %v194, 1.0
    %v197 = vmul.f32 %v189, %v195
    %v198 = vmul.f32 %v190, %v196
    %v199 = vpack.c.bf16 %v198, %v197
    %v200 = vld [vmem:[#allocation8] sm:$0xf]
    %v201 = vld [vmem:[#allocation8 + $0x4] sm:$0xf]
    %v202 = vld [vmem:[#allocation8 + $0x8] sm:$0xf]
    %v203 = vld [vmem:[#allocation8 + $0xc] sm:$0xf]
    %v204 = vld [vmem:[#allocation8 + $0x10] sm:$0xf]
    %v205 = vld [vmem:[#allocation8 + $0x14] sm:$0xf]
    %v206 = vld [vmem:[#allocation8 + $0x18] sm:$0xf]
    %v207 = vld [vmem:[#allocation8 + $0x1c] sm:$0xf]
    %v208 = vld [vmem:[#allocation8 + $0x20] sm:$0xf]
    %v209 = vld [vmem:[#allocation8 + $0x24] sm:$0xf]
    %v210 = vld [vmem:[#allocation8 + $0x28] sm:$0xf]
    %v211 = vld [vmem:[#allocation8 + $0x2c] sm:$0xf]
    %v212 = vld [vmem:[#allocation8 + $0x30] sm:$0xf]
    %v213 = vld [vmem:[#allocation8 + $0x34] sm:$0xf]
    %v214 = vld [vmem:[#allocation8 + $0x38] sm:$0xf]
    %v215 = vld [vmem:[#allocation8 + $0x3c] sm:$0xf]
    %v232 = vunpack.c.l.b16 %v200
    %v233 = vunpack.c.l.b16 %v201
    %v234 = vunpack.c.l.b16 %v202
    %v235 = vunpack.c.l.b16 %v203
    %v236 = vunpack.c.l.b16 %v204
    %v237 = vunpack.c.l.b16 %v205
    %v238 = vunpack.c.l.b16 %v206
    %v239 = vunpack.c.l.b16 %v207
    %v240 = vunpack.c.l.b16 %v208
    %v241 = vunpack.c.l.b16 %v209
    %v242 = vunpack.c.l.b16 %v210
    %v243 = vunpack.c.l.b16 %v211
    %v244 = vunpack.c.l.b16 %v212
    %v245 = vunpack.c.l.b16 %v213
    %v246 = vunpack.c.l.b16 %v214
    %v247 = vunpack.c.l.b16 %v215
    %v248 = vpack.c.b16 %v233, %v232
    %v249 = vpack.c.b16 %v235, %v234
    %v250 = vpack.c.b16 %v237, %v236
    %v251 = vpack.c.b16 %v239, %v238
    %v252 = vpack.c.b16 %v241, %v240
    %v253 = vpack.c.b16 %v243, %v242
    %v254 = vpack.c.b16 %v245, %v244
    %v255 = vpack.c.b16 %v247, %v246
    %264 = vmatprep.subr.bf16.mxu0 0
    %265 = vmatpush1.bf16.msra.mxu0 %v248
    %266 = vmatprep.subr.bf16.mxu0 0
    %267 = vmatpush1.bf16.msra.mxu0 %v249
    %268 = vmatprep.subr.bf16.mxu0 0
    %269 = vmatpush1.bf16.msra.mxu0 %v250
    %270 = vmatprep.subr.bf16.mxu0 0
    %271 = vmatpush1.bf16.msra.mxu0 %v251
    %272 = vmatprep.subr.bf16.mxu0 0
    %273 = vmatpush1.bf16.msra.mxu0 %v252
    %274 = vmatprep.subr.bf16.mxu0 0
    %275 = vmatpush1.bf16.msra.mxu0 %v253
    %276 = vmatprep.subr.bf16.mxu0 0
    %277 = vmatpush1.bf16.msra.mxu0 %v254
    %278 = vmatprep.subr.bf16.mxu0 0
    %279 = vmatpush1.bf16.msra.mxu0 %v255
    %280 = vmatprep.subr.bf16.mxu0 0
    %281 = vmatpush1.bf16.msra.mxu0 0
    %282 = vmatprep.subr.bf16.mxu0 0
    %283 = vmatpush1.bf16.msra.mxu0 0
    %284 = vmatprep.subr.bf16.mxu0 0
    %285 = vmatpush1.bf16.msra.mxu0 0
    %286 = vmatprep.subr.bf16.mxu0 0
    %287 = vmatpush1.bf16.msra.mxu0 0
    %288 = vmatprep.subr.bf16.mxu0 0
    %289 = vmatpush1.bf16.msra.mxu0 0
    %290 = vmatprep.subr.bf16.mxu0 0
    %291 = vmatpush1.bf16.msra.mxu0 0
    %292 = vmatprep.subr.bf16.mxu0 0
    %293 = vmatpush1.bf16.msra.mxu0 0
    %294 = vmatprep.subr.bf16.mxu0 0
    %295 = vmatpush1.bf16.msra.mxu0 0
    %296 = vmatprep.mubr.bf16.mxu0 0
    %297 = vmatmul.mubr.bf16.gmra.mrb[0].mxu0 %v199
    %v298 = vpop.f32.mrb[0].mxu0
    %v299 = vadd.f32 0.0, %v298
    %v300 = vpop.f32.mrb[0].mxu0
    %v301 = vpop.f32.mrb[0].mxu0
    %v302 = vadd.f32 0.0, %v301
    %v303 = vpop.f32.mrb[0].mxu0
    %304 = vdwg.mxu0
    %v305 = vld [vmem:[#allocation2] sm:$0xff]
    %v306 = vld [vmem:[#allocation2 + $0x8] sm:$0xff]
    %v307 = vadd.f32 %v305, %v299
    %v308 = vadd.f32 %v306, %v302
    %309 = vst [vmem:[#allocation2] sm:$0xff] %v307
    %310 = vst [vmem:[#allocation2 + $0x8] sm:$0xff] %v308
    // Predicated region
    $region38: #{tpu_custom_call.1} parent=1 // pred_check
      %p311 = pneg %p63
    $region39: #{tpu_custom_call.1} parent=1 // pred_check_branch
      %313 = sbr.rel (%p311) target = $region41
    $region40: #{tpu_custom_call.1} parent=1 // pred_region
      %v314 = vld [vmem:[#allocation2] sm:$0xff]
      %v315 = vld [vmem:[#allocation2 + $0x8] sm:$0xff]
      %v316 = vld [vmem:[%s4] sm:$0x1]
      %v318 = vlaneseq
      %v319 = vshrl.u32 %v318, 7
      %v320 = vsub.s32 0, %v319
      %v321 = vrot.slane %v316, %v320
      %v323 = vadd.f32 %v314, %v321
      %v324 = vadd.f32 %v315, %v321
      %325 = vst [vmem:[#allocation9] sm:$0xff] %v323
      %326 = vst [vmem:[#allocation9 + $0x8] sm:$0xff] %v324
    $region41: #{tpu_custom_call.1} parent=1 // pred_fallthru
      _
    // Predicated region
    $region42: #{tpu_custom_call.1} parent=1 // pred_check
      _
    $region43: #{tpu_custom_call.1} parent=1 // pred_check_branch
      %328 = sbr.rel (0) target = $region45
    $region44: #{tpu_custom_call.1} parent=1 // pred_region
      %s330 = ssub.s32 256, 256
      %331 = vsyncadd [#allocation5], %s330
      %s332 = sshll.u32 [#allocation9], 4
      %s333 = int_to_ptr.vmem [resolvable:$true] %s332
      %338 = dma.vmem_to_hbm [thread:$0]  %s333, 256, %s5, [#allocation5], 128, 128, 8
    $region45: #{tpu_custom_call.1} parent=1 // pred_fallthru
      _
    // Predicated region
    $region46: #{tpu_custom_call.1} parent=1 // pred_check
      _
    $region47: #{tpu_custom_call.1} parent=1 // pred_check_branch
      %340 = sbr.rel (0) target = $region49
    $region48: #{tpu_custom_call.1} parent=1 // pred_region
      %341 = dma.done [#allocation5], 256
    $region49: #{tpu_custom_call.1} parent=1 // pred_fallthru
      _
    %342 = vsyncpa [#allocation4], 1
    %343 = vsyncpa [#allocation7], 1
    %344 = vsyncpa [#allocation5], 1

</llo_original>
